<compile_context>
chip_gen: v5e
topology: v5e:2x2
jax: 0.10.0
libtpu: 0.0.40
codegen_flags: <defaults>
</compile_context>

<pallas_src>
import dataclasses
from functools import partial
from typing import NamedTuple, Tuple

import jax
import jax.numpy as jnp
from jax.experimental import pallas as pl
from jax.experimental.pallas import tpu as pltpu


# ---- structured input/output mirroring the PyTorch classes -----------------
class JaxTuple(NamedTuple):
    input: jax.Array


@dataclasses.dataclass
class JaxData:
    output: jax.Array
    output2: Tuple[jax.Array, ...] = (jnp.empty((0,)),)


def _round_up(x: int, m: int) -> int:
    return ((x + m - 1) // m) * m


def _vmem_budget_bytes() -> int:
    """Generation-aware scoped-VMEM budget (~70% of capacity, <= 100 MiB)."""
    try:
        cap = int(getattr(pltpu.get_tpu_info(), "vmem_capacity_bytes",
                          64 * 1024 * 1024))
    except Exception:
        cap = 64 * 1024 * 1024          # conservative (v7x-sized) fallback
    return int(min(100 * 1024 * 1024, int(cap * 0.70)))


def _tile_options(n: int, cap: int):
    """Legal tile sizes along a lane-constrained dim: 128-multiple divisors of
    n (up to cap) plus the full extent n itself (always legal)."""
    if n % 128 != 0:
        return [n]                      # full extent only (still legal)
    opts = {d for d in range(128, min(n, cap) + 1, 128) if n % d == 0}
    opts.add(n)
    return sorted(opts)


def _select_tiles(M: int, K: int, N_pad: int, itemsize: int, vmem_budget: int):
    # ---- tm: minimize M padding ----
    m8 = _round_up(max(M, 1), 8)
    if m8 <= 512:
        tm = m8
    else:
        cands = [512, 448, 384, 320, 256, 192, 128]
        tm = min(cands, key=lambda t: ((-m8) % t, -t))
    M_pad = _round_up(m8, tm)

    # ---- tk/tn: largest tile area that fits the (double-buffered) budget ----
    tk_opts = _tile_options(K, 1024)
    tn_opts = _tile_options(N_pad, 2048)
    best_tk, best_tn = tk_opts[0], tn_opts[0]
    for tn in tn_opts:
        for tk in tk_opts:
            # 2x-buffered x / W.T / bias / out tiles + f32 accumulator headroom
            fp = (2 * (tm * tk + tk * tn + tn + tm * tn) + tm * tn) * max(itemsize, 4)
            if fp <= 0.8 * vmem_budget and tk * tn >= best_tk * best_tn:
                best_tk, best_tn = tk, tn
    tk, tn = best_tk, best_tn

    # ---- v7x megacore: keep >= 2 tiles on the parallel (M, N) axes ----
    if (M_pad // tm) * (N_pad // tn) == 1 and tm % 16 == 0:
        tm //= 2
    return tm, tk, tn, M_pad


# ---- Pallas kernels ---------------------------------------------------------
def _linear_kernel_f32(x_ref, wt_ref, b_ref, o_ref):
    # f32 output: accumulate directly into the resident output block.
    @pl.when(pl.program_id(2) == 0)
    def _():
        o_ref[...] = jnp.broadcast_to(b_ref[...], o_ref.shape)

    o_ref[...] += jnp.dot(x_ref[...], wt_ref[...],
                          preferred_element_type=jnp.float32)


def _linear_kernel_acc(x_ref, wt_ref, b_ref, o_ref, acc_ref):
    # Generic path (non-f32 output): f32 scratch accumulator, cast on last K.
    k = pl.program_id(2)

    @pl.when(k == 0)
    def _():
        acc_ref[...] = jnp.broadcast_to(b_ref[...].astype(jnp.float32),
                                        acc_ref.shape)

    acc_ref[...] += jnp.dot(x_ref[...], wt_ref[...],
                            preferred_element_type=jnp.float32)

    @pl.when(k == pl.num_programs(2) - 1)
    def _():
        o_ref[...] = acc_ref[...].astype(o_ref.dtype)


@partial(jax.jit, static_argnums=(3,))
def linear_forward(x: jax.Array, w_t_pad: jax.Array, b_pad: jax.Array,
                   out_features: int) -> jax.Array:
    """x: [M, K]; w_t_pad: [K, N_pad] (= W.T, OUT padded to 128); b_pad: [1, N_pad]."""
    M, K = x.shape
    K_w, N_pad = w_t_pad.shape
    assert K == K_w, "input feature dim must match the weight"

    itemsize = jnp.dtype(x.dtype).itemsize
    vmem_budget = _vmem_budget_bytes()
    tm, tk, tn, M_pad = _select_tiles(M, K, N_pad, itemsize, vmem_budget)
    assert M_pad % tm == 0 and K % tk == 0 and N_pad % tn == 0

    # Only pad M when strictly needed (K is never padded; N padded at init).
    x_p = x if M_pad == M else jnp.pad(x, ((0, M_pad - M), (0, 0)))

    grid = (M_pad // tm, N_pad // tn, K // tk)
    cost = pl.CostEstimate(
        flops=2 * M_pad * N_pad * K,
        transcendentals=0,
        bytes_accessed=(M_pad * K + K * N_pad + N_pad + M_pad * N_pad) * itemsize,
    )

    direct_f32 = x.dtype == jnp.float32
    kernel = _linear_kernel_f32 if direct_f32 else _linear_kernel_acc
    scratch = [] if direct_f32 else [pltpu.VMEM((tm, tn), jnp.float32)]

    out_pad = pl.pallas_call(
        kernel,
        out_shape=jax.ShapeDtypeStruct((M_pad, N_pad), x.dtype),
        grid_spec=pltpu.PrefetchScalarGridSpec(
            num_scalar_prefetch=0,
            grid=grid,
            in_specs=[
                pl.BlockSpec((tm, tk), lambda i, j, k: (i, k)),   # x
                pl.BlockSpec((tk, tn), lambda i, j, k: (k, j)),   # W.T
                pl.BlockSpec((1, tn), lambda i, j, k: (0, j)),    # bias
            ],
            out_specs=pl.BlockSpec((tm, tn), lambda i, j, k: (i, j)),
            scratch_shapes=scratch,
        ),
        compiler_params=pltpu.CompilerParams(
            dimension_semantics=("parallel", "parallel", "arbitrary"),
            vmem_limit_bytes=vmem_budget,
        ),
        cost_estimate=cost,
    )(x_p, w_t_pad, b_pad)

    if M_pad != M or N_pad != out_features:
        out_pad = out_pad[:M, :out_features]
    return out_pad


class Linear:
    """JAX/Pallas equivalent of the PyTorch `Linear` wrapper module."""

    def __init__(self, in_features: int, out_features: int, key: jax.Array):
        # Deterministic init mimicking torch.nn.Linear's U(-1/sqrt(in), 1/sqrt(in)).
        kw, kb = jax.random.split(key)
        bound = 1.0 / (in_features ** 0.5)
        self.weight = jax.random.uniform(
            kw, (out_features, in_features), jnp.float32, -bound, bound
        )
        self.bias = jax.random.uniform(
            kb, (out_features,), jnp.float32, -bound, bound
        )
        self.in_features = in_features
        self.out_features = out_features

        # One-time parameter prep (out of the hot path): transpose to lane-major
        # [IN, OUT]; pad ONLY the lane (OUT) dim up to the 128-lane constraint.
        # K is left unpadded — full-extent / divisor K tiles are used instead.
        n_pad = _round_up(out_features, 128)
        self.w_t_padded = jnp.pad(
            self.weight.T, ((0, 0), (0, n_pad - out_features))
        )
        self.b_padded = jnp.pad(
            self.bias, (0, n_pad - out_features)
        ).reshape(1, n_pad)
        # TODO(synk): optional bf16 weight storage (keeps f32 accumulation)
        # would halve weight HBM/VMEM traffic but changes numerics vs torch f32.

    def __call__(self, inputs: JaxTuple) -> JaxData:
        return JaxData(
            linear_forward(
                inputs.input, self.w_t_padded, self.b_padded, self.out_features
            )
        )


if __name__ == "__main__":
    key = jax.random.PRNGKey(0)
    k_param, k_x, k_param2, k_x2 = jax.random.split(key, 4)

    # Small shape matching the module spec (OUT padded to 128, K full-extent).
    batch, in_features, out_features = 8, 32, 16
    model = Linear(in_features, out_features, k_param)
    x = jax.random.normal(k_x, (batch, in_features), jnp.float32)
    result = model(JaxTuple(input=x))
    out = jax.block_until_ready(result.output)
    ref = x @ model.weight.T + model.bias
    assert out.shape == (batch, out_features)
    assert jnp.allclose(out, ref, atol=1e-4, rtol=1e-4)

    # Larger path: exercises divisor tile selection, VMEM-resident weight,
    # megacore M split, and bias-init accumulation (no padding anywhere).
    batch2, in2, out2 = 320, 1280, 640
    model2 = Linear(in2, out2, k_param2)
    x2 = jax.random.normal(k_x2, (batch2, in2), jnp.float32)
    out_big = jax.block_until_ready(model2(JaxTuple(input=x2)).output)
    ref_big = x2 @ model2.weight.T + model2.bias
    assert out_big.shape == (batch2, out2)
    assert jnp.allclose(out_big, ref_big, atol=5e-3, rtol=5e-4)

    print("KERNEL_OK")
</pallas_src>

<mosaic_0001>
module attributes {stable_mosaic.version = 11 : i64} {
  func.func @_linear_kernel_f32(%arg0: i32, %arg1: i32, %arg2: i32, %arg3: memref<8x32xf32, #tpu.memory_space<vmem>>, %arg4: memref<32x128xf32, #tpu.memory_space<vmem>>, %arg5: memref<1x128xf32, #tpu.memory_space<vmem>>, %arg6: memref<8x128xf32, #tpu.memory_space<vmem>>) attributes {dimension_semantics = [#tpu.dimension_semantics<parallel>, #tpu.dimension_semantics<parallel>, #tpu.dimension_semantics<arbitrary>], iteration_bounds = array<i64: 1, 1, 1>, scalar_prefetch = 0 : i64, scratch_operands = 0 : i64, tpu.core_type = #tpu.core_type<tc>, window_params = [{transform_indices = @transform_0, window_bounds = array<i64: 8, 32>}, {transform_indices = @transform_1, window_bounds = array<i64: 32, 128>}, {transform_indices = @transform_2, window_bounds = array<i64: 1, 128>}, {transform_indices = @transform_3, window_bounds = array<i64: 8, 128>}]} {
    %c0_i32 = arith.constant 0 : i32
    %0 = arith.cmpi eq, %arg2, %c0_i32 : i32
    %1 = arith.extui %0 : i1 to i32
    %c0_i32_0 = arith.constant 0 : i32
    %2 = arith.cmpi ne, %1, %c0_i32_0 : i32
    scf.if %2 {
      %c0_8 = arith.constant 0 : index
      %c0_9 = arith.constant 0 : index
      %9 = vector.load %arg5[%c0_8, %c0_9] : memref<1x128xf32, #tpu.memory_space<vmem>>, vector<1x128xf32>
      %10 = vector.shape_cast %9 : vector<1x128xf32> to vector<1x128xf32>
      %11 = vector.broadcast %10 : vector<1x128xf32> to vector<8x128xf32>
      %c0_10 = arith.constant 0 : index
      %c0_11 = arith.constant 0 : index
      %12 = vector.load %arg6[%c0_10, %c0_11] : memref<8x128xf32, #tpu.memory_space<vmem>>, vector<8x128xf32>
      tpu.vector_store %arg6[%c0_10, %c0_11], %11 {strides = array<i32>} : memref<8x128xf32, #tpu.memory_space<vmem>>, vector<8x128xf32>,
    } else {
    }
    %c0 = arith.constant 0 : index
    %c0_1 = arith.constant 0 : index
    %3 = vector.load %arg6[%c0, %c0_1] : memref<8x128xf32, #tpu.memory_space<vmem>>, vector<8x128xf32>
    %c0_2 = arith.constant 0 : index
    %c0_3 = arith.constant 0 : index
    %4 = vector.load %arg3[%c0_2, %c0_3] : memref<8x32xf32, #tpu.memory_space<vmem>>, vector<8x32xf32>
    %c0_4 = arith.constant 0 : index
    %c0_5 = arith.constant 0 : index
    %5 = vector.load %arg4[%c0_4, %c0_5] : memref<32x128xf32, #tpu.memory_space<vmem>>, vector<32x128xf32>
    %cst = arith.constant dense<0.000000e+00> : vector<8x128xf32>
    %6 = tpu.matmul %4, %5, %cst {dimension_numbers = #tpu.dot_dimension_numbers<[1], [0], [0], [1], [0, 0, 1, 1], [], []>} : vector<8x32xf32>, vector<32x128xf32>, vector<8x128xf32> -> vector<8x128xf32>
    %7 = arith.addf %3, %6 : vector<8x128xf32>
    %c0_6 = arith.constant 0 : index
    %c0_7 = arith.constant 0 : index
    %8 = vector.load %arg6[%c0_6, %c0_7] : memref<8x128xf32, #tpu.memory_space<vmem>>, vector<8x128xf32>
    tpu.vector_store %arg6[%c0_6, %c0_7], %7 {strides = array<i32>} : memref<8x128xf32, #tpu.memory_space<vmem>>, vector<8x128xf32>,
    return
  }
  func.func @transform_0(%arg0: i32, %arg1: i32, %arg2: i32) -> (i32, i32) {
    %c0_i32 = arith.constant 0 : i32
    return %arg0, %arg2 : i32, i32
  }
  func.func @transform_1(%arg0: i32, %arg1: i32, %arg2: i32) -> (i32, i32) {
    %c0_i32 = arith.constant 0 : i32
    return %arg2, %arg1 : i32, i32
  }
  func.func @transform_2(%arg0: i32, %arg1: i32, %arg2: i32) -> (i32, i32) {
    %c0_i32 = arith.constant 0 : i32
    %c0_i32_0 = arith.constant 0 : i32
    return %c0_i32, %arg1 : i32, i32
  }
  func.func @transform_3(%arg0: i32, %arg1: i32, %arg2: i32) -> (i32, i32) {
    %c0_i32 = arith.constant 0 : i32
    return %arg0, %arg1 : i32, i32
  }
}

</mosaic_0001>

<llo_original>
// kernel: linear_forward.1
$region0: #{linear_forward.1}
  #allocation0 [shape = 'u32[]', space=smem, size = 0x4, offset = 0x4, fixed_abs, tag = 'smem constant byte address 0x4 - core index']
  #allocation1 [shape = 'u32[72,128]{1,0:T(1,128)}', space=vmem, size = 0x9000, scoped, tag = 'internal scratch']
  %s0 = inlined_call_operand.hbm [shape: f32[8,32], index: 0, kind: input, shape index: {}]
  %s1 = inlined_call_operand.hbm [shape: f32[32,128], index: 1, kind: input, shape index: {}]
  %s2 = inlined_call_operand.vmem [shape: f32[1,128], index: 2, kind: input, shape index: {}]
  %s3 = inlined_call_operand.hbm [shape: f32[8,128], index: 3, kind: output, shape index: {}]
  %s4 = sld [smem:[#allocation0]]
  $region34: #{linear_forward.1} parent=0
    _
  %s6 = ssub.s32 1, %s4
  %s7 = scalar_select 0, %s6, %s4
  $region1: #{linear_forward.1} parent=0
    #allocation2 [shape = 'u8[4096]{0}', space=vmem, size = 0x1000, scoped, tag = 'input window, operand 0, single buffered']
    #allocation3 [shape = 's32[1]{0}', space=sflag, size = 0x4, scoped, tag = 'scoped memory for linear_forward.1']
    #allocation4 [shape = 's32[1]{0}', space=sflag, size = 0x4, scoped, tag = 'scoped memory for linear_forward.1']
    #allocation5 [shape = 'u8[16384]{0}', space=vmem, size = 0x4000, scoped, tag = 'input window, operand 1, single buffered']
    #allocation6 [shape = 's32[1]{0}', space=sflag, size = 0x4, scoped, tag = 'scoped memory for linear_forward.1']
    #allocation7 [shape = 'u8[4096]{0}', space=vmem, size = 0x1000, scoped, tag = 'output window, operand 0, single buffered']
    %8 = vsyncpa [#allocation3], 0
    %9 = vsyncpa [#allocation6], 0
    %10 = vsyncpa [#allocation4], 0
    // Predicated region
    $region2: #{linear_forward.1} parent=1 // pred_check
      _
    $region3: #{linear_forward.1} parent=1 // pred_check_branch
      %12 = sbr.rel (0) target = $region5
    $region4: #{linear_forward.1} parent=1 // pred_region
      %14 = vsyncadd [#allocation3], 0
      %s16 = sshll.u32 %s0, 4
      %s17 = int_to_ptr.hbm [resolvable:$true] %s16
      %s18 = sshll.u32 [#allocation2], 4
      %s19 = int_to_ptr.vmem [resolvable:$true] %s18
      %21 = dma.hbm_to_vmem [thread:$0]  %s17, 128, %s19, [#allocation3]
    $region5: #{linear_forward.1} parent=1 // pred_fallthru
      _
    // Predicated region
    $region6: #{linear_forward.1} parent=1 // pred_check
      _
    $region7: #{linear_forward.1} parent=1 // pred_check_branch
      %23 = sbr.rel (0) target = $region9
    $region8: #{linear_forward.1} parent=1 // pred_region
      %25 = vsyncadd [#allocation6], 0
      %s26 = sshll.u32 %s1, 4
      %s27 = int_to_ptr.hbm [resolvable:$true] %s26
      %s28 = sshll.u32 [#allocation5], 4
      %s29 = int_to_ptr.vmem [resolvable:$true] %s28
      %34 = dma.hbm_to_vmem [thread:$0]  %s27, 512, %s29, [#allocation6], 128, 128, 8
    $region9: #{linear_forward.1} parent=1 // pred_fallthru
      _
    // Predicated region
    $region10: #{linear_forward.1} parent=1 // pred_check
      _
    $region11: #{linear_forward.1} parent=1 // pred_check_branch
      %36 = sbr.rel (0) target = $region13
    $region12: #{linear_forward.1} parent=1 // pred_region
      _
    $region13: #{linear_forward.1} parent=1 // pred_fallthru
      _
    // Predicated region
    $region14: #{linear_forward.1} parent=1 // pred_check
      _
    $region15: #{linear_forward.1} parent=1 // pred_check_branch
      %38 = sbr.rel (0) target = $region17
    $region16: #{linear_forward.1} parent=1 // pred_region
      %40 = dma.done [#allocation3], 128
    $region17: #{linear_forward.1} parent=1 // pred_fallthru
      _
    // Predicated region
    $region18: #{linear_forward.1} parent=1 // pred_check
      _
    $region19: #{linear_forward.1} parent=1 // pred_check_branch
      %42 = sbr.rel (0) target = $region21
    $region20: #{linear_forward.1} parent=1 // pred_region
      %44 = dma.done [#allocation6], 512
    $region21: #{linear_forward.1} parent=1 // pred_fallthru
      _
    %p45 = scmp.eq.s32.totalorder 0, 0
    // Predicated region
    $region22: #{linear_forward.1} parent=1 // pred_check
      %p46 = pneg %p45
    $region23: #{linear_forward.1} parent=1 // pred_check_branch
      %48 = sbr.rel (%p46) target = $region25
    $region24: #{linear_forward.1} parent=1 // pred_region
      %v49 = vld [vmem:[%s2] sm:$0x1]
      %v51 = vperm.slane %v49, 0
      %53 = vst [vmem:[#allocation7] sm:$0xff] %v51
    $region25: #{linear_forward.1} parent=1 // pred_fallthru
      _
    %v54 = vld [vmem:[#allocation7] sm:$0xff]
    %v55 = vld [vmem:[#allocation2] sm:$0xff]
    %v56 = vld [vmem:[#allocation5] sm:$0xff]
    %v57 = vld [vmem:[#allocation5 + $0x8] sm:$0xff]
    %v58 = vld [vmem:[#allocation5 + $0x10] sm:$0xff]
    %v59 = vld [vmem:[#allocation5 + $0x18] sm:$0xff]
    %vm60 = vcmask 261120
    %v62 = vsel %vm60, %v55, 0
    %64 = vmatpush.msra.mxu0 0.0
    %65 = vmatpush.msra.mxu0 0.0
    %66 = vmatpush.msra.mxu0 0.0
    %67 = vmatpush.msra.mxu0 0.0
    %68 = vmatpush.msra.mxu0 0.0
    %69 = vmatpush.msra.mxu0 0.0
    %70 = vmatpush.msra.mxu0 0.0
    %71 = vmatpush.msra.mxu0 0.0
    %72 = vmatpush.msra.mxu0 0.0
    %73 = vmatpush.msra.mxu0 0.0
    %74 = vmatpush.msra.mxu0 0.0
    %75 = vmatpush.msra.mxu0 0.0
    %76 = vmatpush.msra.mxu0 %v59
    %77 = vmatpush.msra.mxu0 %v58
    %78 = vmatpush.msra.mxu0 %v57
    %79 = vmatpush.msra.mxu0 %v56
    %80 = vmatmul.f32.gmra.mxu0 %v62
    %v81 = vpop.f32.mrf.mxu0
    %v82 = vadd.f32 0.0, %v81
    %83 = vdwg.mxu0
    %v84 = vadd.f32 %v54, %v82
    %85 = vst [vmem:[#allocation7] sm:$0xff] %v84
    // Predicated region
    $region26: #{linear_forward.1} parent=1 // pred_check
      _
    $region27: #{linear_forward.1} parent=1 // pred_check_branch
      %87 = sbr.rel (0) target = $region29
    $region28: #{linear_forward.1} parent=1 // pred_region
      %89 = vsyncadd [#allocation4], 0
      %s91 = sshll.u32 [#allocation7], 4
      %s92 = int_to_ptr.vmem [resolvable:$true] %s91
      %s93 = sshll.u32 %s3, 4
      %s94 = int_to_ptr.hbm [resolvable:$true] %s93
      %96 = dma.vmem_to_hbm [thread:$0]  %s92, 128, %s94, [#allocation4]
    $region29: #{linear_forward.1} parent=1 // pred_fallthru
      _
    // Predicated region
    $region30: #{linear_forward.1} parent=1 // pred_check
      _
    $region31: #{linear_forward.1} parent=1 // pred_check_branch
      %98 = sbr.rel (0) target = $region33
    $region32: #{linear_forward.1} parent=1 // pred_region
      %100 = dma.done [#allocation4], 128
    $region33: #{linear_forward.1} parent=1 // pred_fallthru
      _
    %101 = vsyncpa [#allocation3], 1
    %102 = vsyncpa [#allocation6], 1
    %103 = vsyncpa [#allocation4], 1

</llo_original>
